<compile_context>
chip_gen: v5e
topology: v5e:2x2
jax: 0.10.0
libtpu: 0.0.40
codegen_flags: <defaults>
</compile_context>

<pallas_src>
import functools

import jax
import jax.numpy as jnp
from jax import lax
from jax.experimental import pallas as pl
from jax.experimental.pallas import tpu as pltpu

LANES = 128
MAX_BLOCK_ROWS = 8192                  # 8192 * 128 * 4B = 4 MiB per f32 block
VMEM_INPUT_BUDGET = 20 * 1024 * 1024   # live double-buffered input bytes cap
VMEM_LIMIT_BYTES = 32 * 1024 * 1024    # scoped VMEM limit (v5e default is 16M)


def _round_up(v, m):
    return ((v + m - 1) // m) * m


def _focal_loss_kernel(x_ref, t_ref, o_ref, *, gamma, block_rows, rows_in_last):
    # Stream in native dtype, compute in f32 on the VPU.
    x = x_ref[...].astype(jnp.float32)
    t = t_ref[...].astype(jnp.float32)

    # Numerically-stable BCE-with-logits (torch's formulation):
    #   bce = max(x, 0) - x*t + log1p(exp(-|x|))
    bce = jnp.maximum(x, 0.0) - x * t + jnp.log1p(jnp.exp(-jnp.abs(x)))
    one_m_pt = 1.0 - jnp.exp(-bce)  # == 1 - exp(-BCE)

    # Integer-gamma fast paths: avoid float pow (exp+log on the EUP).
    g = float(gamma)
    if g == 0.0:
        mod = jnp.ones_like(one_m_pt)
    elif g == 1.0:
        mod = one_m_pt
    elif g == 2.0:
        mod = one_m_pt * one_m_pt
    elif g == 3.0:
        mod = one_m_pt * one_m_pt * one_m_pt
    else:
        mod = one_m_pt ** g

    # NOTE: alpha is folded into the wrapper-side reduction (not applied here).
    focal = mod * bce

    if rows_in_last == block_rows:
        # Every block is fully valid: no masking work at all.
        o_ref[...] = jnp.sum(focal, axis=0, keepdims=True)
    else:
        i = pl.program_id(0)
        last = pl.num_programs(0) - 1

        @pl.when(i < last)
        def _():
            o_ref[...] = jnp.sum(focal, axis=0, keepdims=True)

        @pl.when(i == last)
        def _():
            # Mask the undefined rows of the partial last block.  Row-level
            # compare only (block-local), so no int32 overflow concerns.
            row_ids = lax.broadcasted_iota(jnp.int32, focal.shape, 0)
            masked = jnp.where(row_ids < rows_in_last, focal, 0.0)
            o_ref[...] = jnp.sum(masked, axis=0, keepdims=True)


def _bce_focal_unscaled(x, t, gamma):
    """Plain-JAX (1 - exp(-bce))**gamma * bce for the ragged tail."""
    x = x.astype(jnp.float32)
    t = t.astype(jnp.float32)
    bce = jnp.maximum(x, 0.0) - x * t + jnp.log1p(jnp.exp(-jnp.abs(x)))
    return (1.0 - jnp.exp(-bce)) ** jnp.float32(gamma) * bce


def focal_loss(inputs, targets, alpha=0.7, gamma=2.0):
    """Pallas TPU focal loss. inputs = logits, targets = labels (any shape)."""
    x = inputs.reshape(-1)
    t = targets.reshape(-1)
    n = int(x.shape[0])

    rows = n // LANES          # 128-aligned prefix handled by the kernel
    tail = n - rows * LANES    # <128-element ragged tail handled in plain JAX

    total = jnp.float32(0.0)

    if rows > 0:
        # Free contiguous prefix slice — no full-array pad/copy.
        x2 = x[: rows * LANES].reshape(rows, LANES)
        t2 = t[: rows * LANES].reshape(rows, LANES)

        # Tile sizing: as big as possible, capped by MAX_BLOCK_ROWS and by a
        # live-VMEM budget (2 inputs x 2 pipeline buffers), rounded to a
        # multiple of 32 rows (bf16/int8 sublane packing friendly).
        bytes_per_row = LANES * (x2.dtype.itemsize + t2.dtype.itemsize)
        max_rows_by_vmem = VMEM_INPUT_BUDGET // (2 * bytes_per_row)
        block_rows = min(MAX_BLOCK_ROWS, max_rows_by_vmem, _round_up(rows, 32))
        block_rows = max(32, (block_rows // 32) * 32)

        grid_n = pl.cdiv(rows, block_rows)
        rows_in_last = rows - (grid_n - 1) * block_rows

        kernel = functools.partial(
            _focal_loss_kernel,
            gamma=float(gamma),
            block_rows=int(block_rows),
            rows_in_last=int(rows_in_last),
        )

        blk = pl.BlockSpec((block_rows, LANES), lambda i: (i, 0))
        n_k = rows * LANES

        partials = pl.pallas_call(
            kernel,
            out_shape=jax.ShapeDtypeStruct((grid_n, LANES), jnp.float32),
            grid=(grid_n,),
            in_specs=[blk, blk],
            out_specs=pl.BlockSpec((1, LANES), lambda i: (i, 0)),
            compiler_params=pltpu.CompilerParams(
                # Independent per-step partials -> safe to shard across TCs
                # (v7x megacore); harmless on single-TC v5e/v6e.
                dimension_semantics=("parallel",),
                vmem_limit_bytes=VMEM_LIMIT_BYTES,
            ),
            cost_estimate=pl.CostEstimate(
                flops=12 * n_k,
                transcendentals=3 * n_k,
                bytes_accessed=n_k * (x2.dtype.itemsize + t2.dtype.itemsize)
                + 4 * grid_n * LANES,
            ),
        )(x2, t2)

        total = total + jnp.sum(partials)

    if tail > 0:
        # Tiny (<128-element) ragged tail: compute directly in JAX and fold
        # into the same sum (avoids a full-array jnp.pad HBM round trip).
        xt = x[rows * LANES:]
        tt = t[rows * LANES:]
        total = total + jnp.sum(_bce_focal_unscaled(xt, tt, gamma))

    # alpha folded into the final (scalar) reduction; mean over all N elements.
    return (total * jnp.float32(alpha)) / jnp.float32(n)


def _focal_loss_ref(inputs, targets, alpha=0.7, gamma=2.0):
    x = inputs.reshape(-1).astype(jnp.float32)
    t = targets.reshape(-1).astype(jnp.float32)
    bce = jnp.maximum(x, 0.0) - x * t + jnp.log1p(jnp.exp(-jnp.abs(x)))
    bce_exp = jnp.exp(-bce)
    return jnp.mean(alpha * (1.0 - bce_exp) ** gamma * bce)


if __name__ == "__main__":
    key = jax.random.PRNGKey(0)
    k1, k2, k3, k4 = jax.random.split(key, 4)

    # Small NCHW-shaped logits / binary targets (e.g. segmentation head output).
    shape = (2, 4, 16, 16)
    inputs = jax.random.normal(k1, shape, dtype=jnp.float32)
    targets = (jax.random.uniform(k2, shape) > 0.5).astype(jnp.float32)

    loss = focal_loss(inputs, targets, alpha=0.7, gamma=2.0)
    loss = jax.block_until_ready(loss)
    ref = _focal_loss_ref(inputs, targets, alpha=0.7, gamma=2.0)
    assert jnp.allclose(loss, ref, rtol=1e-5, atol=1e-6), (loss, ref)

    # Misaligned size: exercises the no-pad ragged-tail path (1000 = 7*128 + 104).
    x_m = jax.random.normal(k3, (1000,), dtype=jnp.float32)
    t_m = (jax.random.uniform(k4, (1000,)) > 0.5).astype(jnp.float32)
    loss_m = jax.block_until_ready(focal_loss(x_m, t_m, alpha=0.7, gamma=2.0))
    ref_m = _focal_loss_ref(x_m, t_m, alpha=0.7, gamma=2.0)
    assert jnp.allclose(loss_m, ref_m, rtol=1e-5, atol=1e-6), (loss_m, ref_m)

    print("KERNEL_OK")
</pallas_src>

<mosaic_0001>
module attributes {stable_mosaic.version = 11 : i64} {
  func.func @_focal_loss_kernel(%arg0: i32, %arg1: memref<32x128xf32, #tpu.memory_space<vmem>>, %arg2: memref<32x128xf32, #tpu.memory_space<vmem>>, %arg3: memref<1x128xf32, #tpu.memory_space<vmem>>) attributes {dimension_semantics = [#tpu.dimension_semantics<parallel>], iteration_bounds = array<i64: 1>, scalar_prefetch = 0 : i64, scratch_operands = 0 : i64, tpu.core_type = #tpu.core_type<tc>, window_params = [{transform_indices = @transform_0, window_bounds = array<i64: 32, 128>}, {transform_indices = @transform_1, window_bounds = array<i64: 32, 128>}, {transform_indices = @transform_2, window_bounds = array<i64: 1, 128>}]} {
    %c0 = arith.constant 0 : index
    %c0_0 = arith.constant 0 : index
    %0 = vector.load %arg1[%c0, %c0_0] : memref<32x128xf32, #tpu.memory_space<vmem>>, vector<32x128xf32>
    %c0_1 = arith.constant 0 : index
    %c0_2 = arith.constant 0 : index
    %1 = vector.load %arg2[%c0_1, %c0_2] : memref<32x128xf32, #tpu.memory_space<vmem>>, vector<32x128xf32>
    %cst = arith.constant 0.000000e+00 : f32
    %2 = vector.broadcast %cst : f32 to vector<32x128xf32>
    %3 = arith.maximumf %0, %2 : vector<32x128xf32>
    %4 = arith.mulf %0, %1 : vector<32x128xf32>
    %5 = arith.subf %3, %4 : vector<32x128xf32>
    %6 = math.absf %0 : vector<32x128xf32>
    %cst_3 = arith.constant 0.000000e+00 : f32
    %7 = vector.broadcast %cst_3 : f32 to vector<32x128xf32>
    %8 = arith.subf %7, %6 : vector<32x128xf32>
    %9 = math.exp %8 : vector<32x128xf32>
    %10 = math.log1p %9 : vector<32x128xf32>
    %11 = arith.addf %5, %10 : vector<32x128xf32>
    %cst_4 = arith.constant 0.000000e+00 : f32
    %12 = vector.broadcast %cst_4 : f32 to vector<32x128xf32>
    %13 = arith.subf %12, %11 : vector<32x128xf32>
    %14 = math.exp %13 : vector<32x128xf32>
    %cst_5 = arith.constant 1.000000e+00 : f32
    %15 = vector.broadcast %cst_5 : f32 to vector<32x128xf32>
    %16 = arith.subf %15, %14 : vector<32x128xf32>
    %17 = arith.mulf %16, %16 : vector<32x128xf32>
    %18 = arith.mulf %17, %11 : vector<32x128xf32>
    %c0_i32 = arith.constant 0 : i32
    %19 = arith.cmpi slt, %arg0, %c0_i32 : i32
    %20 = arith.extui %19 : i1 to i32
    %c0_i32_6 = arith.constant 0 : i32
    %21 = arith.cmpi ne, %20, %c0_i32_6 : i32
    scf.if %21 {
      %cst_9 = arith.constant dense<0.000000e+00> : vector<128xf32>
      %25 = vector.multi_reduction <add>, %18, %cst_9 [0] : vector<32x128xf32> to vector<128xf32>
      %26 = vector.shape_cast %25 : vector<128xf32> to vector<1x128xf32>
      %c0_10 = arith.constant 0 : index
      %c0_11 = arith.constant 0 : index
      %27 = vector.load %arg3[%c0_10, %c0_11] : memref<1x128xf32, #tpu.memory_space<vmem>>, vector<1x128xf32>
      tpu.vector_store %arg3[%c0_10, %c0_11], %26 {strides = array<i32>} : memref<1x128xf32, #tpu.memory_space<vmem>>, vector<1x128xf32>,
    } else {
    }
    %c0_i32_7 = arith.constant 0 : i32
    %22 = arith.cmpi eq, %arg0, %c0_i32_7 : i32
    %23 = arith.extui %22 : i1 to i32
    %c0_i32_8 = arith.constant 0 : i32
    %24 = arith.cmpi ne, %23, %c0_i32_8 : i32
    scf.if %24 {
      %25 = tpu.iota {dimensions = array<i32: 0>} : vector<32x128xi32>
      %c16_i32 = arith.constant 16 : i32
      %26 = vector.broadcast %c16_i32 : i32 to vector<32x128xi32>
      %27 = arith.cmpi slt, %25, %26 : vector<32x128xi32>
      %cst_9 = arith.constant 0.000000e+00 : f32
      %28 = vector.broadcast %cst_9 : f32 to vector<32x128xf32>
      %29 = arith.select %27, %18, %28 : vector<32x128xi1>, vector<32x128xf32>
      %cst_10 = arith.constant dense<0.000000e+00> : vector<128xf32>
      %30 = vector.multi_reduction <add>, %29, %cst_10 [0] : vector<32x128xf32> to vector<128xf32>
      %31 = vector.shape_cast %30 : vector<128xf32> to vector<1x128xf32>
      %c0_11 = arith.constant 0 : index
      %c0_12 = arith.constant 0 : index
      %32 = vector.load %arg3[%c0_11, %c0_12] : memref<1x128xf32, #tpu.memory_space<vmem>>, vector<1x128xf32>
      tpu.vector_store %arg3[%c0_11, %c0_12], %31 {strides = array<i32>} : memref<1x128xf32, #tpu.memory_space<vmem>>, vector<1x128xf32>,
    } else {
    }
    return
  }
  func.func @transform_0(%arg0: i32) -> (i32, i32) {
    %c0_i32 = arith.constant 0 : i32
    %c0_i32_0 = arith.constant 0 : i32
    return %arg0, %c0_i32 : i32, i32
  }
  func.func @transform_1(%arg0: i32) -> (i32, i32) {
    %c0_i32 = arith.constant 0 : i32
    %c0_i32_0 = arith.constant 0 : i32
    return %arg0, %c0_i32 : i32, i32
  }
  func.func @transform_2(%arg0: i32) -> (i32, i32) {
    %c0_i32 = arith.constant 0 : i32
    %c0_i32_0 = arith.constant 0 : i32
    return %arg0, %c0_i32 : i32, i32
  }
}

</mosaic_0001>

<llo_original>
// kernel: tpu_custom_call.1
$region0: #{tpu_custom_call.1}
  #allocation0 [shape = 'u32[]', space=smem, size = 0x4, offset = 0x4, fixed_abs, tag = 'smem constant byte address 0x4 - core index']
  #allocation1 [shape = 'u32[72,128]{1,0:T(1,128)}', space=vmem, size = 0x9000, scoped, tag = 'internal scratch']
  %s0 = inlined_call_operand.hbm [shape: f32[16,128], index: 0, kind: input, shape index: {}]
  %s1 = inlined_call_operand.hbm [shape: f32[16,128], index: 1, kind: input, shape index: {}]
  %s2 = inlined_call_operand.hbm [shape: f32[1,128], index: 2, kind: output, shape index: {}]
  %s3 = sld [smem:[#allocation0]]
  $region34: #{tpu_custom_call.1} parent=0
    _
  %s5 = ssub.s32 1, %s3
  %s6 = scalar_select 0, %s5, %s3
  $region1: #{tpu_custom_call.1} parent=0
    #allocation2 [shape = 'u8[16384]{0}', space=vmem, size = 0x4000, scoped, tag = 'input window, operand 0, single buffered']
    #allocation3 [shape = 's32[1]{0}', space=sflag, size = 0x4, scoped, tag = 'scoped memory for tpu_custom_call.1']
    #allocation4 [shape = 's32[1]{0}', space=sflag, size = 0x4, scoped, tag = 'scoped memory for tpu_custom_call.1']
    #allocation5 [shape = 'u8[16384]{0}', space=vmem, size = 0x4000, scoped, tag = 'input window, operand 1, single buffered']
    #allocation6 [shape = 's32[1]{0}', space=sflag, size = 0x4, scoped, tag = 'scoped memory for tpu_custom_call.1']
    #allocation7 [shape = 'u8[512]{0}', space=vmem, size = 0x400, scoped, tag = 'output window, operand 0, single buffered']
    %7 = vsyncpa [#allocation3], 0
    %8 = vsyncpa [#allocation6], 0
    %9 = vsyncpa [#allocation4], 0
    // Predicated region
    $region2: #{tpu_custom_call.1} parent=1 // pred_check
      _
    $region3: #{tpu_custom_call.1} parent=1 // pred_check_branch
      %11 = sbr.rel (0) target = $region5
    $region4: #{tpu_custom_call.1} parent=1 // pred_region
      %13 = vsyncadd [#allocation3], 256
      %s14 = sshll.u32 %s0, 4
      %s15 = int_to_ptr.hbm [resolvable:$true] %s14
      %s16 = sshll.u32 [#allocation2], 4
      %s17 = int_to_ptr.vmem [resolvable:$true] %s16
      %22 = dma.hbm_to_vmem [thread:$0]  %s15, 256, %s17, [#allocation3], 128, 128, 8
    $region5: #{tpu_custom_call.1} parent=1 // pred_fallthru
      _
    // Predicated region
    $region6: #{tpu_custom_call.1} parent=1 // pred_check
      _
    $region7: #{tpu_custom_call.1} parent=1 // pred_check_branch
      %24 = sbr.rel (0) target = $region9
    $region8: #{tpu_custom_call.1} parent=1 // pred_region
      %26 = vsyncadd [#allocation6], 256
      %s27 = sshll.u32 %s1, 4
      %s28 = int_to_ptr.hbm [resolvable:$true] %s27
      %s29 = sshll.u32 [#allocation5], 4
      %s30 = int_to_ptr.vmem [resolvable:$true] %s29
      %35 = dma.hbm_to_vmem [thread:$0]  %s28, 256, %s30, [#allocation6], 128, 128, 8
    $region9: #{tpu_custom_call.1} parent=1 // pred_fallthru
      _
    // Predicated region
    $region10: #{tpu_custom_call.1} parent=1 // pred_check
      _
    $region11: #{tpu_custom_call.1} parent=1 // pred_check_branch
      %37 = sbr.rel (0) target = $region13
    $region12: #{tpu_custom_call.1} parent=1 // pred_region
      %39 = dma.done [#allocation3], 512
    $region13: #{tpu_custom_call.1} parent=1 // pred_fallthru
      _
    // Predicated region
    $region14: #{tpu_custom_call.1} parent=1 // pred_check
      _
    $region15: #{tpu_custom_call.1} parent=1 // pred_check_branch
      %41 = sbr.rel (0) target = $region17
    $region16: #{tpu_custom_call.1} parent=1 // pred_region
      %43 = dma.done [#allocation6], 512
    $region17: #{tpu_custom_call.1} parent=1 // pred_fallthru
      _
    %v44 = vld [vmem:[#allocation2] sm:$0xff]
    %v45 = vld [vmem:[#allocation2 + $0x8] sm:$0xff]
    %v46 = vld [vmem:[#allocation2 + $0x10] sm:$0xff]
    %v47 = vld [vmem:[#allocation2 + $0x18] sm:$0xff]
    %v48 = vld [vmem:[#allocation5] sm:$0xff]
    %v49 = vld [vmem:[#allocation5 + $0x8] sm:$0xff]
    %v50 = vld [vmem:[#allocation5 + $0x10] sm:$0xff]
    %v51 = vld [vmem:[#allocation5 + $0x18] sm:$0xff]
    %v52 = vmax.f32 %v44, 0.0
    %v53 = vmax.f32 %v45, 0.0
    %v54 = vmax.f32 %v46, 0.0
    %v55 = vmax.f32 %v47, 0.0
    %v56 = vmul.f32 %v44, %v48
    %v57 = vmul.f32 %v45, %v49
    %v58 = vmul.f32 %v46, %v50
    %v59 = vmul.f32 %v47, %v51
    %v60 = vsub.f32 %v52, %v56
    %v61 = vsub.f32 %v53, %v57
    %v62 = vsub.f32 %v54, %v58
    %v63 = vsub.f32 %v55, %v59
    %v64 = vand.u32 2147483647, %v44
    %v65 = vand.u32 2147483647, %v45
    %v66 = vand.u32 2147483647, %v46
    %v67 = vand.u32 2147483647, %v47
    %v68 = vsub.f32 0.0, %v64
    %v69 = vsub.f32 0.0, %v65
    %v70 = vsub.f32 0.0, %v66
    %v71 = vsub.f32 0.0, %v67
    %v72 = vmul.f32 %v68, 1.442695
    %v73 = vpow.pop %v72
    %v74 = vmul.f32 %v69, 1.442695
    %v75 = vpow.pop %v74
    %v76 = vmul.f32 %v70, 1.442695
    %v77 = vpow.pop %v76
    %v78 = vmul.f32 %v71, 1.442695
    %v79 = vpow.pop %v78
    %v80 = vadd.f32 %v73, 1.0
    %v81 = vlog2.pop %v80
    %v82 = vmul.f32 %v81, 0.6931472
    %v83 = vmul.f32 -0.5, %v73
    %v84 = vadd.f32 %v83, 1.0
    %v85 = vmul.f32 %v84, %v73
    %v86 = vand.u32 2147483647, %v73
    %vm87 = vcmp.lt.f32.partialorder %v86, 0.0004427343
    %v88 = vsel %vm87, %v85, %v82
    %v89 = vadd.f32 %v75, 1.0
    %v90 = vlog2.pop %v89
    %v91 = vmul.f32 %v90, 0.6931472
    %v92 = vmul.f32 -0.5, %v75
    %v93 = vadd.f32 %v92, 1.0
    %v94 = vmul.f32 %v93, %v75
    %v95 = vand.u32 2147483647, %v75
    %vm96 = vcmp.lt.f32.partialorder %v95, 0.0004427343
    %v97 = vsel %vm96, %v94, %v91
    %v98 = vadd.f32 %v77, 1.0
    %v99 = vlog2.pop %v98
    %v100 = vmul.f32 %v99, 0.6931472
    %v101 = vmul.f32 -0.5, %v77
    %v102 = vadd.f32 %v101, 1.0
    %v103 = vmul.f32 %v102, %v77
    %v104 = vand.u32 2147483647, %v77
    %vm105 = vcmp.lt.f32.partialorder %v104, 0.0004427343
    %v106 = vsel %vm105, %v103, %v100
    %v107 = vadd.f32 %v79, 1.0
    %v108 = vlog2.pop %v107
    %v109 = vmul.f32 %v108, 0.6931472
    %v110 = vmul.f32 -0.5, %v79
    %v111 = vadd.f32 %v110, 1.0
    %v112 = vmul.f32 %v111, %v79
    %v113 = vand.u32 2147483647, %v79
    %vm114 = vcmp.lt.f32.partialorder %v113, 0.0004427343
    %v115 = vsel %vm114, %v112, %v109
    %v116 = vadd.f32 %v60, %v88
    %v117 = vadd.f32 %v61, %v97
    %v118 = vadd.f32 %v62, %v106
    %v119 = vadd.f32 %v63, %v115
    %v120 = vsub.f32 0.0, %v116
    %v121 = vsub.f32 0.0, %v117
    %v122 = vsub.f32 0.0, %v118
    %v123 = vsub.f32 0.0, %v119
    %v124 = vmul.f32 %v120, 1.442695
    %v125 = vpow.pop %v124
    %v126 = vmul.f32 %v121, 1.442695
    %v127 = vpow.pop %v126
    %v128 = vmul.f32 %v122, 1.442695
    %v129 = vpow.pop %v128
    %v130 = vmul.f32 %v123, 1.442695
    %v131 = vpow.pop %v130
    %v132 = vsub.f32 1.0, %v125
    %v133 = vsub.f32 1.0, %v127
    %v134 = vsub.f32 1.0, %v129
    %v135 = vsub.f32 1.0, %v131
    %v136 = vmul.f32 %v132, %v132
    %v137 = vmul.f32 %v133, %v133
    %v138 = vmul.f32 %v134, %v134
    %v139 = vmul.f32 %v135, %v135
    %v140 = vmul.f32 %v136, %v116
    %v141 = vmul.f32 %v137, %v117
    %v142 = vmul.f32 %v138, %v118
    %v143 = vmul.f32 %v139, %v119
    %p144 = scmp.lt.s32.totalorder 0, 0
    // Predicated region
    $region18: #{tpu_custom_call.1} parent=1 // pred_check
      %p145 = pneg %p144
    $region19: #{tpu_custom_call.1} parent=1 // pred_check_branch
      %147 = sbr.rel (%p145) target = $region21
    $region20: #{tpu_custom_call.1} parent=1 // pred_region
      %v148 = vadd.f32 %v140, %v141
      %v149 = vadd.f32 %v148, %v142
      %v150 = vadd.f32 %v149, %v143
      %v151 = vrot.slane %v150, 4
      %v152 = vadd.f32 %v150, %v151
      %v153 = vrot.slane %v152, 2
      %v154 = vadd.f32 %v152, %v153
      %v155 = vrot.slane %v154, 1
      %v156 = vadd.f32 %v154, %v155
      %157 = vst [vmem:[#allocation7] sm:$0x1] %v156
    $region21: #{tpu_custom_call.1} parent=1 // pred_fallthru
      _
    %p158 = scmp.eq.s32.totalorder 0, 0
    // Predicated region
    $region22: #{tpu_custom_call.1} parent=1 // pred_check
      %p159 = pneg %p158
    $region23: #{tpu_custom_call.1} parent=1 // pred_check_branch
      %161 = sbr.rel (%p159) target = $region25
    $region24: #{tpu_custom_call.1} parent=1 // pred_region
      %v162 = vlaneseq
      %v163 = vshrl.u32 %v162, 7
      %v164 = vadd.s32 %v163, 8
      %v165 = vadd.s32 %v163, 16
      %v166 = vadd.s32 %v163, 24
      %vm167 = vcmp.lt.s32.totalorder %v163, 16
      %vm168 = vcmp.lt.s32.totalorder %v164, 16
      %vm169 = vcmp.lt.s32.totalorder %v165, 16
      %vm170 = vcmp.lt.s32.totalorder %v166, 16
      %v171 = vsel %vm167, %v140, 0.0
      %v172 = vsel %vm168, %v141, 0.0
      %v173 = vsel %vm169, %v142, 0.0
      %v174 = vsel %vm170, %v143, 0.0
      %v175 = vadd.f32 %v171, %v172
      %v176 = vadd.f32 %v175, %v173
      %v177 = vadd.f32 %v176, %v174
      %v178 = vrot.slane %v177, 4
      %v179 = vadd.f32 %v177, %v178
      %v180 = vrot.slane %v179, 2
      %v181 = vadd.f32 %v179, %v180
      %v182 = vrot.slane %v181, 1
      %v183 = vadd.f32 %v181, %v182
      %184 = vst [vmem:[#allocation7] sm:$0x1] %v183
    $region25: #{tpu_custom_call.1} parent=1 // pred_fallthru
      _
    // Predicated region
    $region26: #{tpu_custom_call.1} parent=1 // pred_check
      _
    $region27: #{tpu_custom_call.1} parent=1 // pred_check_branch
      %186 = sbr.rel (0) target = $region29
    $region28: #{tpu_custom_call.1} parent=1 // pred_region
      %188 = vsyncadd [#allocation4], 0
      %s190 = sshll.u32 [#allocation7], 4
      %s191 = int_to_ptr.vmem [resolvable:$true] %s190
      %s192 = sshll.u32 %s2, 4
      %s193 = int_to_ptr.hbm [resolvable:$true] %s192
      %195 = dma.vmem_to_hbm [thread:$0]  %s191, 16, %s193, [#allocation4]
    $region29: #{tpu_custom_call.1} parent=1 // pred_fallthru
      _
    // Predicated region
    $region30: #{tpu_custom_call.1} parent=1 // pred_check
      _
    $region31: #{tpu_custom_call.1} parent=1 // pred_check_branch
      %197 = sbr.rel (0) target = $region33
    $region32: #{tpu_custom_call.1} parent=1 // pred_region
      %199 = dma.done [#allocation4], 16
    $region33: #{tpu_custom_call.1} parent=1 // pred_fallthru
      _
    %200 = vsyncpa [#allocation3], 1
    %201 = vsyncpa [#allocation6], 1
    %202 = vsyncpa [#allocation4], 1

</llo_original>
